<compile_context>
chip_gen: v5e
topology: v5e:2x2
jax: 0.10.0
libtpu: 0.0.40
codegen_flags: <defaults>
</compile_context>

<pallas_src>
import functools

import numpy as np
import jax
import jax.numpy as jnp
from jax import lax
from jax.experimental import pallas as pl
from jax.experimental.pallas import tpu as pltpu


def _round_up(a, b):
    return (a + b - 1) // b * b


def _vmem_budget():
    """(tile_target_bytes, vmem_limit_bytes, fast_path_cap_bytes) per generation."""
    try:
        cap = int(pltpu.get_tpu_info().vmem_capacity_bytes)
    except Exception:
        cap = 64 * 1024 * 1024                       # conservative default (v7x)
    if cap <= 64 * 1024 * 1024:                      # v7x: 64 MiB per TC
        return 8 * 1024 * 1024, 48 * 1024 * 1024, 24 * 1024 * 1024
    return 16 * 1024 * 1024, 64 * 1024 * 1024, 48 * 1024 * 1024


# ---------------- pass 1: per-tile partial column sums (megacore-parallel) -------------
def _stats_kernel(x_ref, sum_ref, sq_ref, *, n_rows):
    tr = x_ref.shape[0]
    xt = x_ref[...].astype(jnp.float32)                              # (TR, E)
    if n_rows % tr != 0:                                             # static: only if ragged
        row = lax.broadcasted_iota(jnp.int32, xt.shape, 0)
        valid = (pl.program_id(0) * tr + row) < n_rows
        xt = jnp.where(valid, xt, 0.0)                               # OOB rows contribute 0
    sum_ref[...] = jnp.sum(xt, axis=0, keepdims=True)                # (1, E)
    sq_ref[...] = jnp.sum(xt * xt, axis=0, keepdims=True)            # (1, E)


# ---------------- pass 2: pure elementwise FMA (scale precomputed) ---------------------
def _norm_kernel(x_ref, scale_ref, beta_ref, out_ref):
    y = x_ref[...].astype(jnp.float32) * scale_ref[...] + beta_ref[...]
    out_ref[...] = y.astype(out_ref.dtype)


# ---------------- single-pass fast path: x resident in VMEM, one HBM read --------------
def _fused_kernel(x_ref, alpha_ref, beta_ref, eps_ref, out_ref):
    xt = x_ref[...].astype(jnp.float32)                              # (R, E)
    n = xt.shape[0] * xt.shape[1]
    total = jnp.sum(xt)
    total_sq = jnp.sum(xt * xt)
    mean = total / n
    var = jnp.maximum(total_sq - n * mean * mean, 0.0) / (n - 1)
    std = jnp.sqrt(var)
    scale = alpha_ref[...] / (std + eps_ref[...])                    # (1, E)
    out_ref[...] = (xt * scale + beta_ref[...]).astype(out_ref.dtype)


def rmsnorm_forward(x, alpha, beta, eps, *, row_tile=None, force_two_pass=False):
    orig_shape = x.shape
    orig_dtype = x.dtype
    E = int(orig_shape[-1])
    R = int(np.prod(orig_shape[:-1])) if len(orig_shape) > 1 else 1
    x2 = x.reshape(R, E)

    alpha2 = alpha.reshape(1, E).astype(jnp.float32)
    beta2 = beta.reshape(1, E).astype(jnp.float32)
    eps2 = eps.reshape(1, E).astype(jnp.float32)

    itemsize = int(jnp.dtype(orig_dtype).itemsize)
    tile_target, vmem_limit, fast_cap = _vmem_budget()
    x_bytes = R * E * itemsize

    # ---- single-pass fast path: in + out (native dtype) + f32 working copy fit VMEM ----
    if (not force_two_pass) and (2 * x_bytes + R * E * 4 + 4 * E * 4) <= fast_cap:
        out2 = pl.pallas_call(
            _fused_kernel,
            out_shape=jax.ShapeDtypeStruct((R, E), orig_dtype),
            in_specs=[pl.BlockSpec(memory_space=pltpu.MemorySpace.VMEM)] * 4,
            out_specs=pl.BlockSpec(memory_space=pltpu.MemorySpace.VMEM),
            compiler_params=pltpu.CompilerParams(vmem_limit_bytes=vmem_limit),
            cost_estimate=pl.CostEstimate(flops=5 * R * E, transcendentals=E + 1,
                                          bytes_accessed=2 * x_bytes + 3 * E * 4),
        )(x2, alpha2, beta2, eps2)
        return out2.reshape(orig_shape)

    # ---- two-pass streaming path ----
    sub = max(8, 32 // max(itemsize, 1))             # sublane pack: f32->8, bf16->16, i8->32
    bytes_per_row = max(E * itemsize, 1)
    TR = (tile_target // bytes_per_row) if row_tile is None else int(row_tile)
    TR = max(sub, (TR // sub) * sub)
    TR = min(TR, _round_up(R, sub))
    num_tiles = (R + TR - 1) // TR

    # pass 1: one traversal of x, per-tile partial sums; "parallel" -> both TCs on v7x.
    col_sum, col_sq = pl.pallas_call(
        functools.partial(_stats_kernel, n_rows=R),
        out_shape=(jax.ShapeDtypeStruct((num_tiles, E), jnp.float32),
                   jax.ShapeDtypeStruct((num_tiles, E), jnp.float32)),
        grid=(num_tiles,),
        in_specs=[pl.BlockSpec((TR, E), lambda i: (i, 0))],
        out_specs=(pl.BlockSpec((1, E), lambda i: (i, 0)),
                   pl.BlockSpec((1, E), lambda i: (i, 0))),
        compiler_params=pltpu.CompilerParams(
            dimension_semantics=("parallel",),
            vmem_limit_bytes=vmem_limit),
        cost_estimate=pl.CostEstimate(flops=3 * R * E, transcendentals=0,
                                      bytes_accessed=x_bytes + 2 * num_tiles * E * 4),
    )(x2)

    # tiny O(num_tiles*E) finalize: global unbiased std (torch .std()), then scale.
    n = R * E
    total = jnp.sum(col_sum)
    total_sq = jnp.sum(col_sq)
    mean = total / n
    var = jnp.maximum(total_sq - n * mean * mean, 0.0) / (n - 1)
    std = jnp.sqrt(var)
    scale = (alpha2 / (std + eps2)).astype(jnp.float32)              # (1, E)

    # pass 2: y = x * scale + beta; partial last output block handled by Pallas.
    out2 = pl.pallas_call(
        _norm_kernel,
        out_shape=jax.ShapeDtypeStruct((R, E), orig_dtype),
        grid=(num_tiles,),
        in_specs=[
            pl.BlockSpec((TR, E), lambda i: (i, 0)),                 # x tile
            pl.BlockSpec((1, E), lambda i: (0, 0)),                  # scale
            pl.BlockSpec((1, E), lambda i: (0, 0)),                  # beta
        ],
        out_specs=pl.BlockSpec((TR, E), lambda i: (i, 0)),
        compiler_params=pltpu.CompilerParams(
            dimension_semantics=("parallel",),
            vmem_limit_bytes=vmem_limit),
        cost_estimate=pl.CostEstimate(flops=2 * R * E, transcendentals=0,
                                      bytes_accessed=2 * x_bytes + 2 * E * 4),
    )(x2, scale, beta2)

    return out2.reshape(orig_shape)


def rmsnorm_ref(x, alpha, beta, eps):
    """Pure-JAX mirror of the PyTorch forward (global unbiased std, mean not subtracted)."""
    std = jnp.std(x.astype(jnp.float32), ddof=1)
    return x / (std + eps) * alpha + beta


if __name__ == "__main__":
    key = jax.random.PRNGKey(0)
    kx, ka, kb = jax.random.split(key, 3)
    batch, seq, embed = 2, 300, 256                 # 600 rows, embed 256
    x = jax.random.normal(kx, (batch, seq, embed), jnp.float32)
    alpha = 1.0 + 0.05 * jax.random.normal(ka, (embed,), jnp.float32)
    beta = 0.02 * jax.random.normal(kb, (embed,), jnp.float32)
    eps = jnp.full((embed,), 1e-6, jnp.float32)

    ref = rmsnorm_ref(x, alpha, beta, eps)

    # fast single-pass path (x fits in VMEM)
    out_fast = jax.block_until_ready(rmsnorm_forward(x, alpha, beta, eps))
    err_fast = float(jnp.max(jnp.abs(out_fast - ref)))
    assert out_fast.shape == x.shape and np.isfinite(err_fast) and err_fast < 1e-2, \
        f"fast-path max abs err {err_fast}"

    # two-pass streaming path with a ragged last tile (600 rows, TR=128 -> 5 tiles)
    out_tiled = jax.block_until_ready(
        rmsnorm_forward(x, alpha, beta, eps, row_tile=128, force_two_pass=True))
    err_tiled = float(jnp.max(jnp.abs(out_tiled - ref)))
    assert out_tiled.shape == x.shape and np.isfinite(err_tiled) and err_tiled < 1e-2, \
        f"two-pass max abs err {err_tiled}"

    print("KERNEL_OK")
</pallas_src>

<mosaic_0001>
module attributes {stable_mosaic.version = 11 : i64} {
  func.func @_fused_kernel(%arg0: memref<600x256xf32, #tpu.memory_space<vmem>>, %arg1: memref<1x256xf32, #tpu.memory_space<vmem>>, %arg2: memref<1x256xf32, #tpu.memory_space<vmem>>, %arg3: memref<1x256xf32, #tpu.memory_space<vmem>>, %arg4: memref<600x256xf32, #tpu.memory_space<vmem>>) attributes {dimension_semantics = [], scalar_prefetch = 0 : i64, scratch_operands = 0 : i64, tpu.core_type = #tpu.core_type<tc>} {
    %c0 = arith.constant 0 : index
    %c0_0 = arith.constant 0 : index
    %0 = vector.load %arg0[%c0, %c0_0] : memref<600x256xf32, #tpu.memory_space<vmem>>, vector<600x256xf32>
    %1 = vector.shape_cast %0 : vector<600x256xf32> to vector<1x600x256xf32>
    %cst = arith.constant dense<0.000000e+00> : vector<1xf32>
    %2 = vector.multi_reduction <add>, %1, %cst [1, 2] : vector<1x600x256xf32> to vector<1xf32>
    %3 = vector.shape_cast %2 : vector<1xf32> to vector<1x1x1xf32>
    %4 = vector.extract %3[0, 0, 0] : f32 from vector<1x1x1xf32>
    %5 = arith.mulf %0, %0 : vector<600x256xf32>
    %6 = vector.shape_cast %5 : vector<600x256xf32> to vector<1x600x256xf32>
    %cst_1 = arith.constant dense<0.000000e+00> : vector<1xf32>
    %7 = vector.multi_reduction <add>, %6, %cst_1 [1, 2] : vector<1x600x256xf32> to vector<1xf32>
    %8 = vector.shape_cast %7 : vector<1xf32> to vector<1x1x1xf32>
    %9 = vector.extract %8[0, 0, 0] : f32 from vector<1x1x1xf32>
    %cst_2 = arith.constant 1.536000e+05 : f32
    %10 = arith.divf %4, %cst_2 : f32
    %cst_3 = arith.constant 1.536000e+05 : f32
    %11 = arith.mulf %cst_3, %10 : f32
    %12 = arith.mulf %11, %10 : f32
    %13 = arith.subf %9, %12 : f32
    %cst_4 = arith.constant 0.000000e+00 : f32
    %14 = arith.maximumf %13, %cst_4 : f32
    %cst_5 = arith.constant 1.535990e+05 : f32
    %15 = arith.divf %14, %cst_5 : f32
    %16 = math.sqrt %15 : f32
    %c0_6 = arith.constant 0 : index
    %c0_7 = arith.constant 0 : index
    %17 = vector.load %arg1[%c0_6, %c0_7] : memref<1x256xf32, #tpu.memory_space<vmem>>, vector<1x256xf32>
    %c0_8 = arith.constant 0 : index
    %c0_9 = arith.constant 0 : index
    %18 = vector.load %arg3[%c0_8, %c0_9] : memref<1x256xf32, #tpu.memory_space<vmem>>, vector<1x256xf32>
    %19 = vector.broadcast %16 : f32 to vector<1x256xf32>
    %20 = arith.addf %19, %18 : vector<1x256xf32>
    %21 = arith.divf %17, %20 : vector<1x256xf32>
    %22 = vector.broadcast %21 : vector<1x256xf32> to vector<600x256xf32>
    %23 = arith.mulf %0, %22 : vector<600x256xf32>
    %c0_10 = arith.constant 0 : index
    %c0_11 = arith.constant 0 : index
    %24 = vector.load %arg2[%c0_10, %c0_11] : memref<1x256xf32, #tpu.memory_space<vmem>>, vector<1x256xf32>
    %25 = vector.broadcast %24 : vector<1x256xf32> to vector<600x256xf32>
    %26 = arith.addf %23, %25 : vector<600x256xf32>
    %c0_12 = arith.constant 0 : index
    %c0_13 = arith.constant 0 : index
    %27 = vector.load %arg4[%c0_12, %c0_13] : memref<600x256xf32, #tpu.memory_space<vmem>>, vector<600x256xf32>
    tpu.vector_store %arg4[%c0_12, %c0_13], %26 {strides = array<i32>} : memref<600x256xf32, #tpu.memory_space<vmem>>, vector<600x256xf32>,
    return
  }
}

</mosaic_0001>

<llo_original>
// kernel: tpu_custom_call.1
$region0: #{tpu_custom_call.1}
  #allocation0 [shape = 'u32[]', space=smem, size = 0x4, offset = 0x4, fixed_abs, tag = 'smem constant byte address 0x4 - core index']
  #allocation1 [shape = 'u32[72,128]{1,0:T(1,128)}', space=vmem, size = 0x9000, scoped, tag = 'internal scratch']
  %s0 = inlined_call_operand.hbm [shape: f32[600,256], index: 0, kind: input, shape index: {}]
  %s1 = inlined_call_operand.hbm [shape: f32[1,256], index: 1, kind: input, shape index: {}]
  %s2 = inlined_call_operand.hbm [shape: f32[1,256], index: 2, kind: input, shape index: {}]
  %s3 = inlined_call_operand.vmem [shape: f32[1,256], index: 3, kind: input, shape index: {}]
  %s4 = inlined_call_operand.hbm [shape: f32[600,256], index: 4, kind: output, shape index: {}]
  %s5 = sld [smem:[#allocation0]]
  $region38: #{tpu_custom_call.1} parent=0
    _
  %s7 = ssub.s32 1, %s5
  %s8 = scalar_select 0, %s7, %s5
  $region1: #{tpu_custom_call.1} parent=0
    #allocation2 [shape = 'u8[614400]{0}', space=vmem, size = 0x96000, scoped, tag = 'input window, operand 0, single buffered']
    #allocation3 [shape = 's32[1]{0}', space=sflag, size = 0x4, scoped, tag = 'scoped memory for tpu_custom_call.1']
    #allocation4 [shape = 's32[1]{0}', space=sflag, size = 0x4, scoped, tag = 'scoped memory for tpu_custom_call.1']
    #allocation5 [shape = 'u8[1024]{0}', space=vmem, size = 0x400, scoped, tag = 'input window, operand 1, single buffered']
    #allocation6 [shape = 's32[1]{0}', space=sflag, size = 0x4, scoped, tag = 'scoped memory for tpu_custom_call.1']
    #allocation7 [shape = 'u8[1024]{0}', space=vmem, size = 0x400, scoped, tag = 'input window, operand 2, single buffered']
    #allocation8 [shape = 'u8[614400]{0}', space=vmem, size = 0x96000, scoped, tag = 'output window, operand 0, single buffered']
    %9 = vsyncpa [#allocation3], 0
    %10 = vsyncpa [#allocation6], 0
    %11 = vsyncpa [#allocation4], 0
    // Predicated region
    $region2: #{tpu_custom_call.1} parent=1 // pred_check
      _
    $region3: #{tpu_custom_call.1} parent=1 // pred_check_branch
      %13 = sbr.rel (0) target = $region5
    $region4: #{tpu_custom_call.1} parent=1 // pred_region
      %15 = vsyncadd [#allocation3], 0
      %s16 = sshll.u32 %s0, 4
      %s17 = int_to_ptr.hbm [resolvable:$true] %s16
      %s18 = sshll.u32 [#allocation2], 4
      %s19 = int_to_ptr.vmem [resolvable:$true] %s18
      %24 = dma.hbm_to_vmem [thread:$0]  %s17, 19200, %s19, [#allocation3], 256, 256, 16
    $region5: #{tpu_custom_call.1} parent=1 // pred_fallthru
      _
    // Predicated region
    $region6: #{tpu_custom_call.1} parent=1 // pred_check
      _
    $region7: #{tpu_custom_call.1} parent=1 // pred_check_branch
      %26 = sbr.rel (0) target = $region9
    $region8: #{tpu_custom_call.1} parent=1 // pred_region
      %28 = vsyncadd [#allocation6], 0
      %s30 = sshll.u32 %s1, 4
      %s31 = int_to_ptr.hbm [resolvable:$true] %s30
      %s32 = sshll.u32 [#allocation5], 4
      %s33 = int_to_ptr.vmem [resolvable:$true] %s32
      %35 = dma.hbm_to_vmem [thread:$0]  %s31, 32, %s33, [#allocation6]
    $region9: #{tpu_custom_call.1} parent=1 // pred_fallthru
      _
    // Predicated region
    $region10: #{tpu_custom_call.1} parent=1 // pred_check
      _
    $region11: #{tpu_custom_call.1} parent=1 // pred_check_branch
      %37 = sbr.rel (0) target = $region13
    $region12: #{tpu_custom_call.1} parent=1 // pred_region
      %39 = vsyncadd [#allocation6], 0
      %s41 = sshll.u32 %s2, 4
      %s42 = int_to_ptr.hbm [resolvable:$true] %s41
      %s43 = sshll.u32 [#allocation7], 4
      %s44 = int_to_ptr.vmem [resolvable:$true] %s43
      %46 = dma.hbm_to_vmem [thread:$0]  %s42, 32, %s44, [#allocation6]
    $region13: #{tpu_custom_call.1} parent=1 // pred_fallthru
      _
    // Predicated region
    $region14: #{tpu_custom_call.1} parent=1 // pred_check
      _
    $region15: #{tpu_custom_call.1} parent=1 // pred_check_branch
      %48 = sbr.rel (0) target = $region17
    $region16: #{tpu_custom_call.1} parent=1 // pred_region
      _
    $region17: #{tpu_custom_call.1} parent=1 // pred_fallthru
      _
    // Predicated region
    $region18: #{tpu_custom_call.1} parent=1 // pred_check
      _
    $region19: #{tpu_custom_call.1} parent=1 // pred_check_branch
      %50 = sbr.rel (0) target = $region21
    $region20: #{tpu_custom_call.1} parent=1 // pred_region
      %52 = dma.done [#allocation3], 19200
    $region21: #{tpu_custom_call.1} parent=1 // pred_fallthru
      _
    // Predicated region
    $region22: #{tpu_custom_call.1} parent=1 // pred_check
      _
    $region23: #{tpu_custom_call.1} parent=1 // pred_check_branch
      %54 = sbr.rel (0) target = $region25
    $region24: #{tpu_custom_call.1} parent=1 // pred_region
      %56 = dma.done [#allocation6], 32
    $region25: #{tpu_custom_call.1} parent=1 // pred_fallthru
      _
    // Predicated region
    $region26: #{tpu_custom_call.1} parent=1 // pred_check
      _
    $region27: #{tpu_custom_call.1} parent=1 // pred_check_branch
      %58 = sbr.rel (0) target = $region29
    $region28: #{tpu_custom_call.1} parent=1 // pred_region
      %60 = dma.done [#allocation6], 32
    $region29: #{tpu_custom_call.1} parent=1 // pred_fallthru
      _
    %v61 = vld [vmem:[#allocation2] sm:$0xff]
    %v62 = vld [vmem:[#allocation2 + $0x8] sm:$0xff]
    %v63 = vld [vmem:[#allocation2 + $0x10] sm:$0xff]
    %v64 = vld [vmem:[#allocation2 + $0x18] sm:$0xff]
    %v65 = vld [vmem:[#allocation2 + $0x20] sm:$0xff]
    %v66 = vld [vmem:[#allocation2 + $0x28] sm:$0xff]
    %v67 = vld [vmem:[#allocation2 + $0x30] sm:$0xff]
    %v68 = vld [vmem:[#allocation2 + $0x38] sm:$0xff]
    %v69 = vld [vmem:[#allocation2 + $0x40] sm:$0xff]
    %v70 = vld [vmem:[#allocation2 + $0x48] sm:$0xff]
    %v71 = vld [vmem:[#allocation2 + $0x50] sm:$0xff]
    %v72 = vld [vmem:[#allocation2 + $0x58] sm:$0xff]
    %v73 = vld [vmem:[#allocation2 + $0x60] sm:$0xff]
    %v74 = vld [vmem:[#allocation2 + $0x68] sm:$0xff]
    %v75 = vld [vmem:[#allocation2 + $0x70] sm:$0xff]
    %v76 = vld [vmem:[#allocation2 + $0x78] sm:$0xff]
    %v77 = vld [vmem:[#allocation2 + $0x80] sm:$0xff]
    %v78 = vld [vmem:[#allocation2 + $0x88] sm:$0xff]
    %v79 = vld [vmem:[#allocation2 + $0x90] sm:$0xff]
    %v80 = vld [vmem:[#allocation2 + $0x98] sm:$0xff]
    %v81 = vld [vmem:[#allocation2 + $0xa0] sm:$0xff]
    %v82 = vld [vmem:[#allocation2 + $0xa8] sm:$0xff]
    %v83 = vld [vmem:[#allocation2 + $0xb0] sm:$0xff]
    %v84 = vld [vmem:[#allocation2 + $0xb8] sm:$0xff]
    %v85 = vld [vmem:[#allocation2 + $0xc0] sm:$0xff]
    %v86 = vld [vmem:[#allocation2 + $0xc8] sm:$0xff]
    %v87 = vld [vmem:[#allocation2 + $0xd0] sm:$0xff]
    %v88 = vld [vmem:[#allocation2 + $0xd8] sm:$0xff]
    %v89 = vld [vmem:[#allocation2 + $0xe0] sm:$0xff]
    %v90 = vld [vmem:[#allocation2 + $0xe8] sm:$0xff]
    %v91 = vld [vmem:[#allocation2 + $0xf0] sm:$0xff]
    %v92 = vld [vmem:[#allocation2 + $0xf8] sm:$0xff]
    %v93 = vld [vmem:[#allocation2 + $0x100] sm:$0xff]
    %v94 = vld [vmem:[#allocation2 + $0x108] sm:$0xff]
    %v95 = vld [vmem:[#allocation2 + $0x110] sm:$0xff]
    %v96 = vld [vmem:[#allocation2 + $0x118] sm:$0xff]
    %v97 = vld [vmem:[#allocation2 + $0x120] sm:$0xff]
    %v98 = vld [vmem:[#allocation2 + $0x128] sm:$0xff]
    %v99 = vld [vmem:[#allocation2 + $0x130] sm:$0xff]
    %v100 = vld [vmem:[#allocation2 + $0x138] sm:$0xff]
    %v101 = vld [vmem:[#allocation2 + $0x140] sm:$0xff]
    %v102 = vld [vmem:[#allocation2 + $0x148] sm:$0xff]
    %v103 = vld [vmem:[#allocation2 + $0x150] sm:$0xff]
    %v104 = vld [vmem:[#allocation2 + $0x158] sm:$0xff]
    %v105 = vld [vmem:[#allocation2 + $0x160] sm:$0xff]
    %v106 = vld [vmem:[#allocation2 + $0x168] sm:$0xff]
    %v107 = vld [vmem:[#allocation2 + $0x170] sm:$0xff]
    %v108 = vld [vmem:[#allocation2 + $0x178] sm:$0xff]
    %v109 = vld [vmem:[#allocation2 + $0x180] sm:$0xff]
    %v110 = vld [vmem:[#allocation2 + $0x188] sm:$0xff]
    %v111 = vld [vmem:[#allocation2 + $0x190] sm:$0xff]
    %v112 = vld [vmem:[#allocation2 + $0x198] sm:$0xff]
    %v113 = vld [vmem:[#allocation2 + $0x1a0] sm:$0xff]
    %v114 = vld [vmem:[#allocation2 + $0x1a8] sm:$0xff]
    %v115 = vld [vmem:[#allocation2 + $0x1b0] sm:$0xff]
    %v116 = vld [vmem:[#allocation2 + $0x1b8] sm:$0xff]
    %v117 = vld [vmem:[#allocation2 + $0x1c0] sm:$0xff]
    %v118 = vld [vmem:[#allocation2 + $0x1c8] sm:$0xff]
    %v119 = vld [vmem:[#allocation2 + $0x1d0] sm:$0xff]
    %v120 = vld [vmem:[#allocation2 + $0x1d8] sm:$0xff]
    %v121 = vld [vmem:[#allocation2 + $0x1e0] sm:$0xff]
    %v122 = vld [vmem:[#allocation2 + $0x1e8] sm:$0xff]
    %v123 = vld [vmem:[#allocation2 + $0x1f0] sm:$0xff]
    %v124 = vld [vmem:[#allocation2 + $0x1f8] sm:$0xff]
    %v125 = vld [vmem:[#allocation2 + $0x200] sm:$0xff]
    %v126 = vld [vmem:[#allocation2 + $0x208] sm:$0xff]
    %v127 = vld [vmem:[#allocation2 + $0x210] sm:$0xff]
    %v128 = vld [vmem:[#allocation2 + $0x218] sm:$0xff]
    %v129 = vld [vmem:[#allocation2 + $0x220] sm:$0xff]
    %v130 = vld [vmem:[#allocation2 + $0x228] sm:$0xff]
    %v131 = vld [vmem:[#allocation2 + $0x230] sm:$0xff]
    %v132 = vld [vmem:[#allocation2 + $0x238] sm:$0xff]
    %v133 = vld [vmem:[#allocation2 + $0x240] sm:$0xff]
    %v134 = vld [vmem:[#allocation2 + $0x248] sm:$0xff]
    %v135 = vld [vmem:[#allocation2 + $0x250] sm:$0xff]
    %v136 = vld [vmem:[#allocation2 + $0x258] sm:$0xff]
    %v137 = vld [vmem:[#allocation2 + $0x260] sm:$0xff]
    %v138 = vld [vmem:[#allocation2 + $0x268] sm:$0xff]
    %v139 = vld [vmem:[#allocation2 + $0x270] sm:$0xff]
    %v140 = vld [vmem:[#allocation2 + $0x278] sm:$0xff]
    %v141 = vld [vmem:[#allocation2 + $0x280] sm:$0xff]
    %v142 = vld [vmem:[#allocation2 + $0x288] sm:$0xff]
    %v143 = vld [vmem:[#allocation2 + $0x290] sm:$0xff]
    %v144 = vld [vmem:[#allocation2 + $0x298] sm:$0xff]
    %v145 = vld [vmem:[#allocation2 + $0x2a0] sm:$0xff]
    %v146 = vld [vmem:[#allocation2 + $0x2a8] sm:$0xff]
    %v147 = vld [vmem:[#allocation2 + $0x2b0] sm:$0xff]
    %v148 = vld [vmem:[#allocation2 + $0x2b8] sm:$0xff]
    %v149 = vld [vmem:[#allocation2 + $0x2c0] sm:$0xff]
    %v150 = vld [vmem:[#allocation2 + $0x2c8] sm:$0xff]
    %v151 = vld [vmem:[#allocation2 + $0x2d0] sm:$0xff]
    %v152 = vld [vmem:[#allocation2 + $0x2d8] sm:$0xff]
    %v153 = vld [vmem:[#allocation2 + $0x2e0] sm:$0xff]
    %v154 = vld [vmem:[#allocation2 + $0x2e8] sm:$0xff]
    %v155 = vld [vmem:[#allocation2 + $0x2f0] sm:$0xff]
    %v156 = vld [vmem:[#allocation2 + $0x2f8] sm:$0xff]
    %v157 = vld [vmem:[#allocation2 + $0x300] sm:$0xff]
    %v158 = vld [vmem:[#allocation2 + $0x308] sm:$0xff]
    %v159 = vld [vmem:[#allocation2 + $0x310] sm:$0xff]
    %v160 = vld [vmem:[#allocation2 + $0x318] sm:$0xff]
    %v161 = vld [vmem:[#allocation2 + $0x320] sm:$0xff]
    %v162 = vld [vmem:[#allocation2 + $0x328] sm:$0xff]
    %v163 = vld [vmem:[#allocation2 + $0x330] sm:$0xff]
    %v164 = vld [vmem:[#allocation2 + $0x338] sm:$0xff]
    %v165 = vld [vmem:[#allocation2 + $0x340] sm:$0xff]
    %v166 = vld [vmem:[#allocation2 + $0x348] sm:$0xff]
    %v167 = vld [vmem:[#allocation2 + $0x350] sm:$0xff]
    %v168 = vld [vmem:[#allocation2 + $0x358] sm:$0xff]
    %v169 = vld [vmem:[#allocation2 + $0x360] sm:$0xff]
    %v170 = vld [vmem:[#allocation2 + $0x368] sm:$0xff]
    %v171 = vld [vmem:[#allocation2 + $0x370] sm:$0xff]
    %v172 = vld [vmem:[#allocation2 + $0x378] sm:$0xff]
    %v173 = vld [vmem:[#allocation2 + $0x380] sm:$0xff]
    %v174 = vld [vmem:[#allocation2 + $0x388] sm:$0xff]
    %v175 = vld [vmem:[#allocation2 + $0x390] sm:$0xff]
    %v176 = vld [vmem:[#allocation2 + $0x398] sm:$0xff]
    %v177 = vld [vmem:[#allocation2 + $0x3a0] sm:$0xff]
    %v178 = vld [vmem:[#allocation2 + $0x3a8] sm:$0xff]
    %v179 = vld [vmem:[#allocation2 + $0x3b0] sm:$0xff]
    %v180 = vld [vmem:[#allocation2 + $0x3b8] sm:$0xff]
    %v181 = vld [vmem:[#allocation2 + $0x3c0] sm:$0xff]
    %v182 = vld [vmem:[#allocation2 + $0x3c8] sm:$0xff]
    %v183 = vld [vmem:[#allocation2 + $0x3d0] sm:$0xff]
    %v184 = vld [vmem:[#allocation2 + $0x3d8] sm:$0xff]
    %v185 = vld [vmem:[#allocation2 + $0x3e0] sm:$0xff]
    %v186 = vld [vmem:[#allocation2 + $0x3e8] sm:$0xff]
    %v187 = vld [vmem:[#allocation2 + $0x3f0] sm:$0xff]
    %v188 = vld [vmem:[#allocation2 + $0x3f8] sm:$0xff]
    %v189 = vld [vmem:[#allocation2 + $0x400] sm:$0xff]
    %v190 = vld [vmem:[#allocation2 + $0x408] sm:$0xff]
    %v191 = vld [vmem:[#allocation2 + $0x410] sm:$0xff]
    %v192 = vld [vmem:[#allocation2 + $0x418] sm:$0xff]
    %v193 = vld [vmem:[#allocation2 + $0x420] sm:$0xff]
    %v194 = vld [vmem:[#allocation2 + $0x428] sm:$0xff]
    %v195 = vld [vmem:[#allocation2 + $0x430] sm:$0xff]
    %v196 = vld [vmem:[#allocation2 + $0x438] sm:$0xff]
    %v197 = vld [vmem:[#allocation2 + $0x440] sm:$0xff]
    %v198 = vld [vmem:[#allocation2 + $0x448] sm:$0xff]
    %v199 = vld [vmem:[#allocation2 + $0x450] sm:$0xff]
    %v200 = vld [vmem:[#allocation2 + $0x458] sm:$0xff]
    %v201 = vld [vmem:[#allocation2 + $0x460] sm:$0xff]
    %v202 = vld [vmem:[#allocation2 + $0x468] sm:$0xff]
    %v203 = vld [vmem:[#allocation2 + $0x470] sm:$0xff]
    %v204 = vld [vmem:[#allocation2 + $0x478] sm:$0xff]
    %v205 = vld [vmem:[#allocation2 + $0x480] sm:$0xff]
    %v206 = vld [vmem:[#allocation2 + $0x488] sm:$0xff]
    %v207 = vld [vmem:[#allocation2 + $0x490] sm:$0xff]
    %v208 = vld [vmem:[#allocation2 + $0x498] sm:$0xff]
    %v209 = vld [vmem:[#allocation2 + $0x4a0] sm:$0xff]
    %v210 = vld [vmem:[#allocation2 + $0x4a8] sm:$0xff]
    %v211 = vadd.f32 %v61, %v62
    %v212 = vadd.f32 %v211, %v63
    %v213 = vadd.f32 %v212, %v64
    %v214 = vadd.f32 %v213, %v65
    %v215 = vadd.f32 %v214, %v66
    %v216 = vadd.f32 %v215, %v67
    %v217 = vadd.f32 %v216, %v68
    %v218 = vadd.f32 %v217, %v69
    %v219 = vadd.f32 %v218, %v70
    %v220 = vadd.f32 %v219, %v71
    %v221 = vadd.f32 %v220, %v72
    %v222 = vadd.f32 %v221, %v73
    %v223 = vadd.f32 %v222, %v74
    %v224 = vadd.f32 %v223, %v75
    %v225 = vadd.f32 %v224, %v76
    %v226 = vadd.f32 %v225, %v77
    %v227 = vadd.f32 %v226, %v78
    %v228 = vadd.f32 %v227, %v79
    %v229 = vadd.f32 %v228, %v80
    %v230 = vadd.f32 %v229, %v81
    %v231 = vadd.f32 %v230, %v82
    %v232 = vadd.f32 %v231, %v83
    %v233 = vadd.f32 %v232, %v84
    %v234 = vadd.f32 %v233, %v85
    %v235 = vadd.f32 %v234, %v86
    %v236 = vadd.f32 %v235, %v87
    %v237 = vadd.f32 %v236, %v88
    %v238 = vadd.f32 %v237, %v89
    %v239 = vadd.f32 %v238, %v90
    %v240 = vadd.f32 %v239, %v91
    %v241 = vadd.f32 %v240, %v92
    %v242 = vadd.f32 %v241, %v93
    %v243 = vadd.f32 %v242, %v94
    %v244 = vadd.f32 %v243, %v95
    %v245 = vadd.f32 %v244, %v96
    %v246 = vadd.f32 %v245, %v97
    %v247 = vadd.f32 %v246, %v98
    %v248 = vadd.f32 %v247, %v99
    %v249 = vadd.f32 %v248, %v100
    %v250 = vadd.f32 %v249, %v101
    %v251 = vadd.f32 %v250, %v102
    %v252 = vadd.f32 %v251, %v103
    %v253 = vadd.f32 %v252, %v104
    %v254 = vadd.f32 %v253, %v105
    %v255 = vadd.f32 %v254, %v106
    %v256 = vadd.f32 %v255, %v107
    %v257 = vadd.f32 %v256, %v108
    %v258 = vadd.f32 %v257, %v109
    %v259 = vadd.f32 %v258, %v110
    %v260 = vadd.f32 %v259, %v111
    %v261 = vadd.f32 %v260, %v112
    %v262 = vadd.f32 %v261, %v113
    %v263 = vadd.f32 %v262, %v114
    %v264 = vadd.f32 %v263, %v115
    %v265 = vadd.f32 %v264, %v116
    %v266 = vadd.f32 %v265, %v117
    %v267 = vadd.f32 %v266, %v118
    %v268 = vadd.f32 %v267, %v119
    %v269 = vadd.f32 %v268, %v120
    %v270 = vadd.f32 %v269, %v121
    %v271 = vadd.f32 %v270, %v122
    %v272 = vadd.f32 %v271, %v123
    %v273 = vadd.f32 %v272, %v124
    %v274 = vadd.f32 %v273, %v125
    %v275 = vadd.f32 %v274, %v126
    %v276 = vadd.f32 %v275, %v127
    %v277 = vadd.f32 %v276, %v128
    %v278 = vadd.f32 %v277, %v129
    %v279 = vadd.f32 %v278, %v130
    %v280 = vadd.f32 %v279, %v131
    %v281 = vadd.f32 %v280, %v132
    %v282 = vadd.f32 %v281, %v133
    %v283 = vadd.f32 %v282, %v134
    %v284 = vadd.f32 %v283, %v135
    %v285 = vadd.f32 %v284, %v136
    %v286 = vadd.f32 %v285, %v137
    %v287 = vadd.f32 %v286, %v138
    %v288 = vadd.f32 %v287, %v139
    %v289 = vadd.f32 %v288, %v140
    %v290 = vadd.f32 %v289, %v141
    %v291 = vadd.f32 %v290, %v142
    %v292 = vadd.f32 %v291, %v143
    %v293 = vadd.f32 %v292, %v144
    %v294 = vadd.f32 %v293, %v145
    %v295 = vadd.f32 %v294, %v146
    %v296 = vadd.f32 %v295, %v147
    %v297 = vadd.f32 %v296, %v148
    %v298 = vadd.f32 %v297, %v149
    %v299 = vadd.f32 %v298, %v150
    %v300 = vadd.f32 %v299, %v151
    %v301 = vadd.f32 %v300, %v152
    %v302 = vadd.f32 %v301, %v153
    %v303 = vadd.f32 %v302, %v154
    %v304 = vadd.f32 %v303, %v155
    %v305 = vadd.f32 %v304, %v156
    %v306 = vadd.f32 %v305, %v157
    %v307 = vadd.f32 %v306, %v158
    %v308 = vadd.f32 %v307, %v159
    %v309 = vadd.f32 %v308, %v160
    %v310 = vadd.f32 %v309, %v161
    %v311 = vadd.f32 %v310, %v162
    %v312 = vadd.f32 %v311, %v163
    %v313 = vadd.f32 %v312, %v164
    %v314 = vadd.f32 %v313, %v165
    %v315 = vadd.f32 %v314, %v166
    %v316 = vadd.f32 %v315, %v167
    %v317 = vadd.f32 %v316, %v168
    %v318 = vadd.f32 %v317, %v169
    %v319 = vadd.f32 %v318, %v170
    %v320 = vadd.f32 %v319, %v171
    %v321 = vadd.f32 %v320, %v172
    %v322 = vadd.f32 %v321, %v173
    %v323 = vadd.f32 %v322, %v174
    %v324 = vadd.f32 %v323, %v175
    %v325 = vadd.f32 %v324, %v176
    %v326 = vadd.f32 %v325, %v177
    %v327 = vadd.f32 %v326, %v178
    %v328 = vadd.f32 %v327, %v179
    %v329 = vadd.f32 %v328, %v180
    %v330 = vadd.f32 %v329, %v181
    %v331 = vadd.f32 %v330, %v182
    %v332 = vadd.f32 %v331, %v183
    %v333 = vadd.f32 %v332, %v184
    %v334 = vadd.f32 %v333, %v185
    %v335 = vadd.f32 %v334, %v186
    %v336 = vadd.f32 %v335, %v187
    %v337 = vadd.f32 %v336, %v188
    %v338 = vadd.f32 %v337, %v189
    %v339 = vadd.f32 %v338, %v190
    %v340 = vadd.f32 %v339, %v191
    %v341 = vadd.f32 %v340, %v192
    %v342 = vadd.f32 %v341, %v193
    %v343 = vadd.f32 %v342, %v194
    %v344 = vadd.f32 %v343, %v195
    %v345 = vadd.f32 %v344, %v196
    %v346 = vadd.f32 %v345, %v197
    %v347 = vadd.f32 %v346, %v198
    %v348 = vadd.f32 %v347, %v199
    %v349 = vadd.f32 %v348, %v200
    %v350 = vadd.f32 %v349, %v201
    %v351 = vadd.f32 %v350, %v202
    %v352 = vadd.f32 %v351, %v203
    %v353 = vadd.f32 %v352, %v204
    %v354 = vadd.f32 %v353, %v205
    %v355 = vadd.f32 %v354, %v206
    %v356 = vadd.f32 %v355, %v207
    %v357 = vadd.f32 %v356, %v208
    %v358 = vadd.f32 %v357, %v209
    %v359 = vadd.f32 %v358, %v210
    %360 = vadd.xlane.f32.xlu0 %v359
    %v361 = vpop.xlane.xlu0 %360
    %v362 = vrot.slane %v361, 4
    %v363 = vadd.f32 %v361, %v362
    %v364 = vrot.slane %v363, 2
    %v365 = vadd.f32 %v363, %v364
    %v366 = vrot.slane %v365, 1
    %v367 = vadd.f32 %v365, %v366
    %s368 = vtos %v367
    %v369 = vmul.f32 %v61, %v61
    %v370 = vmul.f32 %v62, %v62
    %v371 = vmul.f32 %v63, %v63
    %v372 = vmul.f32 %v64, %v64
    %v373 = vmul.f32 %v65, %v65
    %v374 = vmul.f32 %v66, %v66
    %v375 = vmul.f32 %v67, %v67
    %v376 = vmul.f32 %v68, %v68
    %v377 = vmul.f32 %v69, %v69
    %v378 = vmul.f32 %v70, %v70
    %v379 = vmul.f32 %v71, %v71
    %v380 = vmul.f32 %v72, %v72
    %v381 = vmul.f32 %v73, %v73
    %v382 = vmul.f32 %v74, %v74
    %v383 = vmul.f32 %v75, %v75
    %v384 = vmul.f32 %v76, %v76
    %v385 = vmul.f32 %v77, %v77
    %v386 = vmul.f32 %v78, %v78
    %v387 = vmul.f32 %v79, %v79
    %v388 = vmul.f32 %v80, %v80
    %v389 = vmul.f32 %v81, %v81
    %v390 = vmul.f32 %v82, %v82
    %v391 = vmul.f32 %v83, %v83
    %v392 = vmul.f32 %v84, %v84
    %v393 = vmul.f32 %v85, %v85
    %v394 = vmul.f32 %v86, %v86
    %v395 = vmul.f32 %v87, %v87
    %v396 = vmul.f32 %v88, %v88
    %v397 = vmul.f32 %v89, %v89
    %v398 = vmul.f32 %v90, %v90
    %v399 = vmul.f32 %v91, %v91
    %v400 = vmul.f32 %v92, %v92
    %v401 = vmul.f32 %v93, %v93
    %v402 = vmul.f32 %v94, %v94
    %v403 = vmul.f32 %v95, %v95
    %v404 = vmul.f32 %v96, %v96
    %v405 = vmul.f32 %v97, %v97
    %v406 = vmul.f32 %v98, %v98
    %v407 = vmul.f32 %v99, %v99
    %v408 = vmul.f32 %v100, %v100
    %v409 = vmul.f32 %v101, %v101
    %v410 = vmul.f32 %v102, %v102
    %v411 = vmul.f32 %v103, %v103
    %v412 = vmul.f32 %v104, %v104
    %v413 = vmul.f32 %v105, %v105
    %v414 = vmul.f32 %v106, %v106
    %v415 = vmul.f32 %v107, %v107
    %v416 = vmul.f32 %v108, %v108
    %v417 = vmul.f32 %v109, %v109
    %v418 = vmul.f32 %v110, %v110
    %v419 = vmul.f32 %v111, %v111
    %v420 = vmul.f32 %v112, %v112
    %v421 = vmul.f32 %v113, %v113
    %v422 = vmul.f32 %v114, %v114
    %v423 = vmul.f32 %v115, %v115
    %v424 = vmul.f32 %v116, %v116
    %v425 = vmul.f32 %v117, %v117
    %v426 = vmul.f32 %v118, %v118
    %v427 = vmul.f32 %v119, %v119
    %v428 = vmul.f32 %v120, %v120
    %v429 = vmul.f32 %v121, %v121
    %v430 = vmul.f32 %v122, %v122
    %v431 = vmul.f32 %v123, %v123
    %v432 = vmul.f32 %v124, %v124
    %v433 = vmul.f32 %v125, %v125
    %v434 = vmul.f32 %v126, %v126
    %v435 = vmul.f32 %v127, %v127
    %v436 = vmul.f32 %v128, %v128
    %v437 = vmul.f32 %v129, %v129
    %v438 = vmul.f32 %v130, %v130
    %v439 = vmul.f32 %v131, %v131
    %v440 = vmul.f32 %v132, %v132
    %v441 = vmul.f32 %v133, %v133
    %v442 = vmul.f32 %v134, %v134
    %v443 = vmul.f32 %v135, %v135
    %v444 = vmul.f32 %v136, %v136
    %v445 = vmul.f32 %v137, %v137
    %v446 = vmul.f32 %v138, %v138
    %v447 = vmul.f32 %v139, %v139
    %v448 = vmul.f32 %v140, %v140
    %v449 = vmul.f32 %v141, %v141
    %v450 = vmul.f32 %v142, %v142
    %v451 = vmul.f32 %v143, %v143
    %v452 = vmul.f32 %v144, %v144
    %v453 = vmul.f32 %v145, %v145
    %v454 = vmul.f32 %v146, %v146
    %v455 = vmul.f32 %v147, %v147
    %v456 = vmul.f32 %v148, %v148
    %v457 = vmul.f32 %v149, %v149
    %v458 = vmul.f32 %v150, %v150
    %v459 = vmul.f32 %v151, %v151
    %v460 = vmul.f32 %v152, %v152
    %v461 = vmul.f32 %v153, %v153
    %v462 = vmul.f32 %v154, %v154
    %v463 = vmul.f32 %v155, %v155
    %v464 = vmul.f32 %v156, %v156
    %v465 = vmul.f32 %v157, %v157
    %v466 = vmul.f32 %v158, %v158
    %v467 = vmul.f32 %v159, %v159
    %v468 = vmul.f32 %v160, %v160
    %v469 = vmul.f32 %v161, %v161
    %v470 = vmul.f32 %v162, %v162
    %v471 = vmul.f32 %v163, %v163
    %v472 = vmul.f32 %v164, %v164
    %v473 = vmul.f32 %v165, %v165
    %v474 = vmul.f32 %v166, %v166
    %v475 = vmul.f32 %v167, %v167
    %v476 = vmul.f32 %v168, %v168
    %v477 = vmul.f32 %v169, %v169
    %v478 = vmul.f32 %v170, %v170
    %v479 = vmul.f32 %v171, %v171
    %v480 = vmul.f32 %v172, %v172
    %v481 = vmul.f32 %v173, %v173
    %v482 = vmul.f32 %v174, %v174
    %v483 = vmul.f32 %v175, %v175
    %v484 = vmul.f32 %v176, %v176
    %v485 = vmul.f32 %v177, %v177
    %v486 = vmul.f32 %v178, %v178
    %v487 = vmul.f32 %v179, %v179
    %v488 = vmul.f32 %v180, %v180
    %v489 = vmul.f32 %v181, %v181
    %v490 = vmul.f32 %v182, %v182
    %v491 = vmul.f32 %v183, %v183
    %v492 = vmul.f32 %v184, %v184
    %v493 = vmul.f32 %v185, %v185
    %v494 = vmul.f32 %v186, %v186
    %v495 = vmul.f32 %v187, %v187
    %v496 = vmul.f32 %v188, %v188
    %v497 = vmul.f32 %v189, %v189
    %v498 = vmul.f32 %v190, %v190
    %v499 = vmul.f32 %v191, %v191
    %v500 = vmul.f32 %v192, %v192
    %v501 = vmul.f32 %v193, %v193
    %v502 = vmul.f32 %v194, %v194
    %v503 = vmul.f32 %v195, %v195
    %v504 = vmul.f32 %v196, %v196
    %v505 = vmul.f32 %v197, %v197
    %v506 = vmul.f32 %v198, %v198
    %v507 = vmul.f32 %v199, %v199
    %v508 = vmul.f32 %v200, %v200
    %v509 = vmul.f32 %v201, %v201
    %v510 = vmul.f32 %v202, %v202
    %v511 = vmul.f32 %v203, %v203
    %v512 = vmul.f32 %v204, %v204
    %v513 = vmul.f32 %v205, %v205
    %v514 = vmul.f32 %v206, %v206
    %v515 = vmul.f32 %v207, %v207
    %v516 = vmul.f32 %v208, %v208
    %v517 = vmul.f32 %v209, %v209
    %v518 = vmul.f32 %v210, %v210
    %v519 = vadd.f32 %v369, %v370
    %v520 = vadd.f32 %v519, %v371
    %v521 = vadd.f32 %v520, %v372
    %v522 = vadd.f32 %v521, %v373
    %v523 = vadd.f32 %v522, %v374
    %v524 = vadd.f32 %v523, %v375
    %v525 = vadd.f32 %v524, %v376
    %v526 = vadd.f32 %v525, %v377
    %v527 = vadd.f32 %v526, %v378
    %v528 = vadd.f32 %v527, %v379
    %v529 = vadd.f32 %v528, %v380
    %v530 = vadd.f32 %v529, %v381
    %v531 = vadd.f32 %v530, %v382
    %v532 = vadd.f32 %v531, %v383
    %v533 = vadd.f32 %v532, %v384
    %v534 = vadd.f32 %v533, %v385
    %v535 = vadd.f32 %v534, %v386
    %v536 = vadd.f32 %v535, %v387
    %v537 = vadd.f32 %v536, %v388
    %v538 = vadd.f32 %v537, %v389
    %v539 = vadd.f32 %v538, %v390
    %v540 = vadd.f32 %v539, %v391
    %v541 = vadd.f32 %v540, %v392
    %v542 = vadd.f32 %v541, %v393
    %v543 = vadd.f32 %v542, %v394
    %v544 = vadd.f32 %v543, %v395
    %v545 = vadd.f32 %v544, %v396
    %v546 = vadd.f32 %v545, %v397
    %v547 = vadd.f32 %v546, %v398
    %v548 = vadd.f32 %v547, %v399
    %v549 = vadd.f32 %v548, %v400
    %v550 = vadd.f32 %v549, %v401
    %v551 = vadd.f32 %v550, %v402
    %v552 = vadd.f32 %v551, %v403
    %v553 = vadd.f32 %v552, %v404
    %v554 = vadd.f32 %v553, %v405
    %v555 = vadd.f32 %v554, %v406
    %v556 = vadd.f32 %v555, %v407
    %v557 = vadd.f32 %v556, %v408
    %v558 = vadd.f32 %v557, %v409
    %v559 = vadd.f32 %v558, %v410
    %v560 = vadd.f32 %v559, %v411
    %v561 = vadd.f32 %v560, %v412
    %v562 = vadd.f32 %v561, %v413
    %v563 = vadd.f32 %v562, %v414
    %v564 = vadd.f32 %v563, %v415
    %v565 = vadd.f32 %v564, %v416
    %v566 = vadd.f32 %v565, %v417
    %v567 = vadd.f32 %v566, %v418
    %v568 = vadd.f32 %v567, %v419
    %v569 = vadd.f32 %v568, %v420
    %v570 = vadd.f32 %v569, %v421
    %v571 = vadd.f32 %v570, %v422
    %v572 = vadd.f32 %v571, %v423
    %v573 = vadd.f32 %v572, %v424
    %v574 = vadd.f32 %v573, %v425
    %v575 = vadd.f32 %v574, %v426
    %v576 = vadd.f32 %v575, %v427
    %v577 = vadd.f32 %v576, %v428
    %v578 = vadd.f32 %v577, %v429
    %v579 = vadd.f32 %v578, %v430
    %v580 = vadd.f32 %v579, %v431
    %v581 = vadd.f32 %v580, %v432
    %v582 = vadd.f32 %v581, %v433
    %v583 = vadd.f32 %v582, %v434
    %v584 = vadd.f32 %v583, %v435
    %v585 = vadd.f32 %v584, %v436
    %v586 = vadd.f32 %v585, %v437
    %v587 = vadd.f32 %v586, %v438
    %v588 = vadd.f32 %v587, %v439
    %v589 = vadd.f32 %v588, %v440
    %v590 = vadd.f32 %v589, %v441
    %v591 = vadd.f32 %v590, %v442
    %v592 = vadd.f32 %v591, %v443
    %v593 = vadd.f32 %v592, %v444
    %v594 = vadd.f32 %v593, %v445
    %v595 = vadd.f32 %v594, %v446
    %v596 = vadd.f32 %v595, %v447
    %v597 = vadd.f32 %v596, %v448
    %v598 = vadd.f32 %v597, %v449
    %v599 = vadd.f32 %v598, %v450
    %v600 = vadd.f32 %v599, %v451
    %v601 = vadd.f32 %v600, %v452
    %v602 = vadd.f32 %v601, %v453
    %v603 = vadd.f32 %v602, %v454
    %v604 = vadd.f32 %v603, %v455
    %v605 = vadd.f32 %v604, %v456
    %v606 = vadd.f32 %v605, %v457
    %v607 = vadd.f32 %v606, %v458
    %v608 = vadd.f32 %v607, %v459
    %v609 = vadd.f32 %v608, %v460
    %v610 = vadd.f32 %v609, %v461
    %v611 = vadd.f32 %v610, %v462
    %v612 = vadd.f32 %v611, %v463
    %v613 = vadd.f32 %v612, %v464
    %v614 = vadd.f32 %v613, %v465
    %v615 = vadd.f32 %v614, %v466
    %v616 = vadd.f32 %v615, %v467
    %v617 = vadd.f32 %v616, %v468
    %v618 = vadd.f32 %v617, %v469
    %v619 = vadd.f32 %v618, %v470
    %v620 = vadd.f32 %v619, %v471
    %v621 = vadd.f32 %v620, %v472
    %v622 = vadd.f32 %v621, %v473
    %v623 = vadd.f32 %v622, %v474
    %v624 = vadd.f32 %v623, %v475
    %v625 = vadd.f32 %v624, %v476
    %v626 = vadd.f32 %v625, %v477
    %v627 = vadd.f32 %v626, %v478
    %v628 = vadd.f32 %v627, %v479
    %v629 = vadd.f32 %v628, %v480
    %v630 = vadd.f32 %v629, %v481
    %v631 = vadd.f32 %v630, %v482
    %v632 = vadd.f32 %v631, %v483
    %v633 = vadd.f32 %v632, %v484
    %v634 = vadd.f32 %v633, %v485
    %v635 = vadd.f32 %v634, %v486
    %v636 = vadd.f32 %v635, %v487
    %v637 = vadd.f32 %v636, %v488
    %v638 = vadd.f32 %v637, %v489
    %v639 = vadd.f32 %v638, %v490
    %v640 = vadd.f32 %v639, %v491
    %v641 = vadd.f32 %v640, %v492
    %v642 = vadd.f32 %v641, %v493
    %v643 = vadd.f32 %v642, %v494
    %v644 = vadd.f32 %v643, %v495
    %v645 = vadd.f32 %v644, %v496
    %v646 = vadd.f32 %v645, %v497
    %v647 = vadd.f32 %v646, %v498
    %v648 = vadd.f32 %v647, %v499
    %v649 = vadd.f32 %v648, %v500
    %v650 = vadd.f32 %v649, %v501
    %v651 = vadd.f32 %v650, %v502
    %v652 = vadd.f32 %v651, %v503
    %v653 = vadd.f32 %v652, %v504
    %v654 = vadd.f32 %v653, %v505
    %v655 = vadd.f32 %v654, %v506
    %v656 = vadd.f32 %v655, %v507
    %v657 = vadd.f32 %v656, %v508
    %v658 = vadd.f32 %v657, %v509
    %v659 = vadd.f32 %v658, %v510
    %v660 = vadd.f32 %v659, %v511
    %v661 = vadd.f32 %v660, %v512
    %v662 = vadd.f32 %v661, %v513
    %v663 = vadd.f32 %v662, %v514
    %v664 = vadd.f32 %v663, %v515
    %v665 = vadd.f32 %v664, %v516
    %v666 = vadd.f32 %v665, %v517
    %v667 = vadd.f32 %v666, %v518
    %668 = vadd.xlane.f32.xlu0 %v667
    %v669 = vpop.xlane.xlu0 %668
    %v670 = vrot.slane %v669, 4
    %v671 = vadd.f32 %v669, %v670
    %v672 = vrot.slane %v671, 2
    %v673 = vadd.f32 %v671, %v672
    %v674 = vrot.slane %v673, 1
    %v675 = vadd.f32 %v673, %v674
    %s676 = vtos %v675
    %v677 = vrcp.pop 153600.0
    %v678 = vmul.f32 153600.0, %v677
    %v679 = vsub.f32 1.0, %v678
    %v680 = vmul.f32 %v677, %v679
    %v681 = vadd.f32 %v677, %v680
    %vm682 = vweird.f32 %v677
    %v683 = vsel %vm682, %v677, %v681
    %s684 = vtos %v683
    %s685 = smul.f32 %s368, %s684
    %s686 = smul.f32 %s685, 153600.0
    %s687 = smul.f32 %s686, %s685
    %s688 = ssub.f32 %s676, %s687
    %s689 = smax.f32 %s688, 0.0
    %v690 = vrcp.pop 153599.0
    %v691 = vmul.f32 153599.0, %v690
    %v692 = vsub.f32 1.0, %v691
    %v693 = vmul.f32 %v690, %v692
    %v694 = vadd.f32 %v690, %v693
    %vm695 = vweird.f32 %v690
    %v696 = vsel %vm695, %v690, %v694
    %s697 = vtos %v696
    %s698 = smul.f32 %s689, %s697
    %v699 = vstv %s698
    %v700 = vrsqrt.pop %v699
    %v701 = vmul.f32 %v700, %v699
    %v702 = vmul.f32 %v701, %v700
    %v703 = vmul.f32 0.5, %v702
    %v704 = vsub.f32 1.5, %v703
    %v705 = vmul.f32 %v700, %v704
    %v706 = vmul.f32 %v699, %v705
    %vm707 = vcmp.eq.f32.partialorder %v699, inf
    %v708 = vsel %vm707, %v699, %v706
    %vm709 = vcmp.eq.f32.partialorder %v699, 0.0
    %v710 = vand.u32 %v699, 2147483648
    %v711 = vsel %vm709, %v710, %v708
    %s712 = vtos %v711
    %v713 = vld [vmem:[#allocation5] sm:$0x3]
    %v714 = vld [vmem:[%s3] sm:$0x3]
    %v715 = vstv %s712
    %v716 = vadd.f32 %v715, %v714
    %v717 = vrcp.pop %v716
    %v718 = vmul.f32 %v716, %v717
    %v719 = vsub.f32 1.0, %v718
    %v720 = vmul.f32 %v717, %v719
    %v721 = vadd.f32 %v717, %v720
    %vm722 = vweird.f32 %v716
    %vm723 = vweird.f32 %v717
    %vm724 = vmor %vm722, %vm723
    %v725 = vsel %vm724, %v717, %v721
    %v726 = vand.u32 2147483647, %v716
    %vm727 = vcmp.eq.f32.partialorder %v726, 8.507059e+37
    %v728 = vand.u32 %v716, 2147483648
    %v729 = vor.u32 1.1754944e-38, %v728
    %v730 = vsel %vm727, %v729, %v725
    %v731 = vmul.f32 %v713, %v730
    %v733 = vperm.slane %v731, 0
    %v734 = vperm.slane %v731, 1
    %v737 = vmul.f32 %v61, %v733
    %v738 = vmul.f32 %v62, %v734
    %v739 = vmul.f32 %v63, %v733
    %v740 = vmul.f32 %v64, %v734
    %v741 = vmul.f32 %v65, %v733
    %v742 = vmul.f32 %v66, %v734
    %v743 = vmul.f32 %v67, %v733
    %v744 = vmul.f32 %v68, %v734
    %v745 = vmul.f32 %v69, %v733
    %v746 = vmul.f32 %v70, %v734
    %v747 = vmul.f32 %v71, %v733
    %v748 = vmul.f32 %v72, %v734
    %v749 = vmul.f32 %v73, %v733
    %v750 = vmul.f32 %v74, %v734
    %v751 = vmul.f32 %v75, %v733
    %v752 = vmul.f32 %v76, %v734
    %v753 = vmul.f32 %v77, %v733
    %v754 = vmul.f32 %v78, %v734
    %v755 = vmul.f32 %v79, %v733
    %v756 = vmul.f32 %v80, %v734
    %v757 = vmul.f32 %v81, %v733
    %v758 = vmul.f32 %v82, %v734
    %v759 = vmul.f32 %v83, %v733
    %v760 = vmul.f32 %v84, %v734
    %v761 = vmul.f32 %v85, %v733
    %v762 = vmul.f32 %v86, %v734
    %v763 = vmul.f32 %v87, %v733
    %v764 = vmul.f32 %v88, %v734
    %v765 = vmul.f32 %v89, %v733
    %v766 = vmul.f32 %v90, %v734
    %v767 = vmul.f32 %v91, %v733
    %v768 = vmul.f32 %v92, %v734
    %v769 = vmul.f32 %v93, %v733
    %v770 = vmul.f32 %v94, %v734
    %v771 = vmul.f32 %v95, %v733
    %v772 = vmul.f32 %v96, %v734
    %v773 = vmul.f32 %v97, %v733
    %v774 = vmul.f32 %v98, %v734
    %v775 = vmul.f32 %v99, %v733
    %v776 = vmul.f32 %v100, %v734
    %v777 = vmul.f32 %v101, %v733
    %v778 = vmul.f32 %v102, %v734
    %v779 = vmul.f32 %v103, %v733
    %v780 = vmul.f32 %v104, %v734
    %v781 = vmul.f32 %v105, %v733
    %v782 = vmul.f32 %v106, %v734
    %v783 = vmul.f32 %v107, %v733
    %v784 = vmul.f32 %v108, %v734
    %v785 = vmul.f32 %v109, %v733
    %v786 = vmul.f32 %v110, %v734
    %v787 = vmul.f32 %v111, %v733
    %v788 = vmul.f32 %v112, %v734
    %v789 = vmul.f32 %v113, %v733
    %v790 = vmul.f32 %v114, %v734
    %v791 = vmul.f32 %v115, %v733
    %v792 = vmul.f32 %v116, %v734
    %v793 = vmul.f32 %v117, %v733
    %v794 = vmul.f32 %v118, %v734
    %v795 = vmul.f32 %v119, %v733
    %v796 = vmul.f32 %v120, %v734
    %v797 = vmul.f32 %v121, %v733
    %v798 = vmul.f32 %v122, %v734
    %v799 = vmul.f32 %v123, %v733
    %v800 = vmul.f32 %v124, %v734
    %v801 = vmul.f32 %v125, %v733
    %v802 = vmul.f32 %v126, %v734
    %v803 = vmul.f32 %v127, %v733
    %v804 = vmul.f32 %v128, %v734
    %v805 = vmul.f32 %v129, %v733
    %v806 = vmul.f32 %v130, %v734
    %v807 = vmul.f32 %v131, %v733
    %v808 = vmul.f32 %v132, %v734
    %v809 = vmul.f32 %v133, %v733
    %v810 = vmul.f32 %v134, %v734
    %v811 = vmul.f32 %v135, %v733
    %v812 = vmul.f32 %v136, %v734
    %v813 = vmul.f32 %v137, %v733
    %v814 = vmul.f32 %v138, %v734
    %v815 = vmul.f32 %v139, %v733
    %v816 = vmul.f32 %v140, %v734
    %v817 = vmul.f32 %v141, %v733
    %v818 = vmul.f32 %v142, %v734
    %v819 = vmul.f32 %v143, %v733
    %v820 = vmul.f32 %v144, %v734
    %v821 = vmul.f32 %v145, %v733
    %v822 = vmul.f32 %v146, %v734
    %v823 = vmul.f32 %v147, %v733
    %v824 = vmul.f32 %v148, %v734
    %v825 = vmul.f32 %v149, %v733
    %v826 = vmul.f32 %v150, %v734
    %v827 = vmul.f32 %v151, %v733
    %v828 = vmul.f32 %v152, %v734
    %v829 = vmul.f32 %v153, %v733
    %v830 = vmul.f32 %v154, %v734
    %v831 = vmul.f32 %v155, %v733
    %v832 = vmul.f32 %v156, %v734
    %v833 = vmul.f32 %v157, %v733
    %v834 = vmul.f32 %v158, %v734
    %v835 = vmul.f32 %v159, %v733
    %v836 = vmul.f32 %v160, %v734
    %v837 = vmul.f32 %v161, %v733
    %v838 = vmul.f32 %v162, %v734
    %v839 = vmul.f32 %v163, %v733
    %v840 = vmul.f32 %v164, %v734
    %v841 = vmul.f32 %v165, %v733
    %v842 = vmul.f32 %v166, %v734
    %v843 = vmul.f32 %v167, %v733
    %v844 = vmul.f32 %v168, %v734
    %v845 = vmul.f32 %v169, %v733
    %v846 = vmul.f32 %v170, %v734
    %v847 = vmul.f32 %v171, %v733
    %v848 = vmul.f32 %v172, %v734
    %v849 = vmul.f32 %v173, %v733
    %v850 = vmul.f32 %v174, %v734
    %v851 = vmul.f32 %v175, %v733
    %v852 = vmul.f32 %v176, %v734
    %v853 = vmul.f32 %v177, %v733
    %v854 = vmul.f32 %v178, %v734
    %v855 = vmul.f32 %v179, %v733
    %v856 = vmul.f32 %v180, %v734
    %v857 = vmul.f32 %v181, %v733
    %v858 = vmul.f32 %v182, %v734
    %v859 = vmul.f32 %v183, %v733
    %v860 = vmul.f32 %v184, %v734
    %v861 = vmul.f32 %v185, %v733
    %v862 = vmul.f32 %v186, %v734
    %v863 = vmul.f32 %v187, %v733
    %v864 = vmul.f32 %v188, %v734
    %v865 = vmul.f32 %v189, %v733
    %v866 = vmul.f32 %v190, %v734
    %v867 = vmul.f32 %v191, %v733
    %v868 = vmul.f32 %v192, %v734
    %v869 = vmul.f32 %v193, %v733
    %v870 = vmul.f32 %v194, %v734
    %v871 = vmul.f32 %v195, %v733
    %v872 = vmul.f32 %v196, %v734
    %v873 = vmul.f32 %v197, %v733
    %v874 = vmul.f32 %v198, %v734
    %v875 = vmul.f32 %v199, %v733
    %v876 = vmul.f32 %v200, %v734
    %v877 = vmul.f32 %v201, %v733
    %v878 = vmul.f32 %v202, %v734
    %v879 = vmul.f32 %v203, %v733
    %v880 = vmul.f32 %v204, %v734
    %v881 = vmul.f32 %v205, %v733
    %v882 = vmul.f32 %v206, %v734
    %v883 = vmul.f32 %v207, %v733
    %v884 = vmul.f32 %v208, %v734
    %v885 = vmul.f32 %v209, %v733
    %v886 = vmul.f32 %v210, %v734
    %v887 = vld [vmem:[#allocation7] sm:$0x3]
    %v889 = vperm.slane %v887, 0
    %v890 = vperm.slane %v887, 1
    %v893 = vadd.f32 %v737, %v889
    %v894 = vadd.f32 %v738, %v890
    %v895 = vadd.f32 %v739, %v889
    %v896 = vadd.f32 %v740, %v890
    %v897 = vadd.f32 %v741, %v889
    %v898 = vadd.f32 %v742, %v890
    %v899 = vadd.f32 %v743, %v889
    %v900 = vadd.f32 %v744, %v890
    %v901 = vadd.f32 %v745, %v889
    %v902 = vadd.f32 %v746, %v890
    %v903 = vadd.f32 %v747, %v889
    %v904 = vadd.f32 %v748, %v890
    %v905 = vadd.f32 %v749, %v889
    %v906 = vadd.f32 %v750, %v890
    %v907 = vadd.f32 %v751, %v889
    %v908 = vadd.f32 %v752, %v890
    %v909 = vadd.f32 %v753, %v889
    %v910 = vadd.f32 %v754, %v890
    %v911 = vadd.f32 %v755, %v889
    %v912 = vadd.f32 %v756, %v890
    %v913 = vadd.f32 %v757, %v889
    %v914 = vadd.f32 %v758, %v890
    %v915 = vadd.f32 %v759, %v889
    %v916 = vadd.f32 %v760, %v890
    %v917 = vadd.f32 %v761, %v889
    %v918 = vadd.f32 %v762, %v890
    %v919 = vadd.f32 %v763, %v889
    %v920 = vadd.f32 %v764, %v890
    %v921 = vadd.f32 %v765, %v889
    %v922 = vadd.f32 %v766, %v890
    %v923 = vadd.f32 %v767, %v889
    %v924 = vadd.f32 %v768, %v890
    %v925 = vadd.f32 %v769, %v889
    %v926 = vadd.f32 %v770, %v890
    %v927 = vadd.f32 %v771, %v889
    %v928 = vadd.f32 %v772, %v890
    %v929 = vadd.f32 %v773, %v889
    %v930 = vadd.f32 %v774, %v890
    %v931 = vadd.f32 %v775, %v889
    %v932 = vadd.f32 %v776, %v890
    %v933 = vadd.f32 %v777, %v889
    %v934 = vadd.f32 %v778, %v890
    %v935 = vadd.f32 %v779, %v889
    %v936 = vadd.f32 %v780, %v890
    %v937 = vadd.f32 %v781, %v889
    %v938 = vadd.f32 %v782, %v890
    %v939 = vadd.f32 %v783, %v889
    %v940 = vadd.f32 %v784, %v890
    %v941 = vadd.f32 %v785, %v889
    %v942 = vadd.f32 %v786, %v890
    %v943 = vadd.f32 %v787, %v889
    %v944 = vadd.f32 %v788, %v890
    %v945 = vadd.f32 %v789, %v889
    %v946 = vadd.f32 %v790, %v890
    %v947 = vadd.f32 %v791, %v889
    %v948 = vadd.f32 %v792, %v890
    %v949 = vadd.f32 %v793, %v889
    %v950 = vadd.f32 %v794, %v890
    %v951 = vadd.f32 %v795, %v889
    %v952 = vadd.f32 %v796, %v890
    %v953 = vadd.f32 %v797, %v889
    %v954 = vadd.f32 %v798, %v890
    %v955 = vadd.f32 %v799, %v889
    %v956 = vadd.f32 %v800, %v890
    %v957 = vadd.f32 %v801, %v889
    %v958 = vadd.f32 %v802, %v890
    %v959 = vadd.f32 %v803, %v889
    %v960 = vadd.f32 %v804, %v890
    %v961 = vadd.f32 %v805, %v889
    %v962 = vadd.f32 %v806, %v890
    %v963 = vadd.f32 %v807, %v889
    %v964 = vadd.f32 %v808, %v890
    %v965 = vadd.f32 %v809, %v889
    %v966 = vadd.f32 %v810, %v890
    %v967 = vadd.f32 %v811, %v889
    %v968 = vadd.f32 %v812, %v890
    %v969 = vadd.f32 %v813, %v889
    %v970 = vadd.f32 %v814, %v890
    %v971 = vadd.f32 %v815, %v889
    %v972 = vadd.f32 %v816, %v890
    %v973 = vadd.f32 %v817, %v889
    %v974 = vadd.f32 %v818, %v890
    %v975 = vadd.f32 %v819, %v889
    %v976 = vadd.f32 %v820, %v890
    %v977 = vadd.f32 %v821, %v889
    %v978 = vadd.f32 %v822, %v890
    %v979 = vadd.f32 %v823, %v889
    %v980 = vadd.f32 %v824, %v890
    %v981 = vadd.f32 %v825, %v889
    %v982 = vadd.f32 %v826, %v890
    %v983 = vadd.f32 %v827, %v889
    %v984 = vadd.f32 %v828, %v890
    %v985 = vadd.f32 %v829, %v889
    %v986 = vadd.f32 %v830, %v890
    %v987 = vadd.f32 %v831, %v889
    %v988 = vadd.f32 %v832, %v890
    %v989 = vadd.f32 %v833, %v889
    %v990 = vadd.f32 %v834, %v890
    %v991 = vadd.f32 %v835, %v889
    %v992 = vadd.f32 %v836, %v890
    %v993 = vadd.f32 %v837, %v889
    %v994 = vadd.f32 %v838, %v890
    %v995 = vadd.f32 %v839, %v889
    %v996 = vadd.f32 %v840, %v890
    %v997 = vadd.f32 %v841, %v889
    %v998 = vadd.f32 %v842, %v890
    %v999 = vadd.f32 %v843, %v889
    %v1000 = vadd.f32 %v844, %v890
    %v1001 = vadd.f32 %v845, %v889
    %v1002 = vadd.f32 %v846, %v890
    %v1003 = vadd.f32 %v847, %v889
    %v1004 = vadd.f32 %v848, %v890
    %v1005 = vadd.f32 %v849, %v889
    %v1006 = vadd.f32 %v850, %v890
    %v1007 = vadd.f32 %v851, %v889
    %v1008 = vadd.f32 %v852, %v890
    %v1009 = vadd.f32 %v853, %v889
    %v1010 = vadd.f32 %v854, %v890
    %v1011 = vadd.f32 %v855, %v889
    %v1012 = vadd.f32 %v856, %v890
    %v1013 = vadd.f32 %v857, %v889
    %v1014 = vadd.f32 %v858, %v890
    %v1015 = vadd.f32 %v859, %v889
    %v1016 = vadd.f32 %v860, %v890
    %v1017 = vadd.f32 %v861, %v889
    %v1018 = vadd.f32 %v862, %v890
    %v1019 = vadd.f32 %v863, %v889
    %v1020 = vadd.f32 %v864, %v890
    %v1021 = vadd.f32 %v865, %v889
    %v1022 = vadd.f32 %v866, %v890
    %v1023 = vadd.f32 %v867, %v889
    %v1024 = vadd.f32 %v868, %v890
    %v1025 = vadd.f32 %v869, %v889
    %v1026 = vadd.f32 %v870, %v890
    %v1027 = vadd.f32 %v871, %v889
    %v1028 = vadd.f32 %v872, %v890
    %v1029 = vadd.f32 %v873, %v889
    %v1030 = vadd.f32 %v874, %v890
    %v1031 = vadd.f32 %v875, %v889
    %v1032 = vadd.f32 %v876, %v890
    %v1033 = vadd.f32 %v877, %v889
    %v1034 = vadd.f32 %v878, %v890
    %v1035 = vadd.f32 %v879, %v889
    %v1036 = vadd.f32 %v880, %v890
    %v1037 = vadd.f32 %v881, %v889
    %v1038 = vadd.f32 %v882, %v890
    %v1039 = vadd.f32 %v883, %v889
    %v1040 = vadd.f32 %v884, %v890
    %v1041 = vadd.f32 %v885, %v889
    %v1042 = vadd.f32 %v886, %v890
    %1043 = vst [vmem:[#allocation8] sm:$0xff] %v893
    %1044 = vst [vmem:[#allocation8 + $0x8] sm:$0xff] %v894
    %1045 = vst [vmem:[#allocation8 + $0x10] sm:$0xff] %v895
    %1046 = vst [vmem:[#allocation8 + $0x18] sm:$0xff] %v896
    %1047 = vst [vmem:[#allocation8 + $0x20] sm:$0xff] %v897
    %1048 = vst [vmem:[#allocation8 + $0x28] sm:$0xff] %v898
    %1049 = vst [vmem:[#allocation8 + $0x30] sm:$0xff] %v899
    %1050 = vst [vmem:[#allocation8 + $0x38] sm:$0xff] %v900
    %1051 = vst [vmem:[#allocation8 + $0x40] sm:$0xff] %v901
    %1052 = vst [vmem:[#allocation8 + $0x48] sm:$0xff] %v902
    %1053 = vst [vmem:[#allocation8 + $0x50] sm:$0xff] %v903
    %1054 = vst [vmem:[#allocation8 + $0x58] sm:$0xff] %v904
    %1055 = vst [vmem:[#allocation8 + $0x60] sm:$0xff] %v905
    %1056 = vst [vmem:[#allocation8 + $0x68] sm:$0xff] %v906
    %1057 = vst [vmem:[#allocation8 + $0x70] sm:$0xff] %v907
    %1058 = vst [vmem:[#allocation8 + $0x78] sm:$0xff] %v908
    %1059 = vst [vmem:[#allocation8 + $0x80] sm:$0xff] %v909
    %1060 = vst [vmem:[#allocation8 + $0x88] sm:$0xff] %v910
    %1061 = vst [vmem:[#allocation8 + $0x90] sm:$0xff] %v911
    %1062 = vst [vmem:[#allocation8 + $0x98] sm:$0xff] %v912
    %1063 = vst [vmem:[#allocation8 + $0xa0] sm:$0xff] %v913
    %1064 = vst [vmem:[#allocation8 + $0xa8] sm:$0xff] %v914
    %1065 = vst [vmem:[#allocation8 + $0xb0] sm:$0xff] %v915
    %1066 = vst [vmem:[#allocation8 + $0xb8] sm:$0xff] %v916
    %1067 = vst [vmem:[#allocation8 + $0xc0] sm:$0xff] %v917
    %1068 = vst [vmem:[#allocation8 + $0xc8] sm:$0xff] %v918
    %1069 = vst [vmem:[#allocation8 + $0xd0] sm:$0xff] %v919
    %1070 = vst [vmem:[#allocation8 + $0xd8] sm:$0xff] %v920
    %1071 = vst [vmem:[#allocation8 + $0xe0] sm:$0xff] %v921
    %1072 = vst [vmem:[#allocation8 + $0xe8] sm:$0xff] %v922
    %1073 = vst [vmem:[#allocation8 + $0xf0] sm:$0xff] %v923
    %1074 = vst [vmem:[#allocation8 + $0xf8] sm:$0xff] %v924
    %1075 = vst [vmem:[#allocation8 + $0x100] sm:$0xff] %v925
    %1076 = vst [vmem:[#allocation8 + $0x108] sm:$0xff] %v926
    %1077 = vst [vmem:[#allocation8 + $0x110] sm:$0xff] %v927
    %1078 = vst [vmem:[#allocation8 + $0x118] sm:$0xff] %v928
    %1079 = vst [vmem:[#allocation8 + $0x120] sm:$0xff] %v929
    %1080 = vst [vmem:[#allocation8 + $0x128] sm:$0xff] %v930
    %1081 = vst [vmem:[#allocation8 + $0x130] sm:$0xff] %v931
    %1082 = vst [vmem:[#allocation8 + $0x138] sm:$0xff] %v932
    %1083 = vst [vmem:[#allocation8 + $0x140] sm:$0xff] %v933
    %1084 = vst [vmem:[#allocation8 + $0x148] sm:$0xff] %v934
    %1085 = vst [vmem:[#allocation8 + $0x150] sm:$0xff] %v935
    %1086 = vst [vmem:[#allocation8 + $0x158] sm:$0xff] %v936
    %1087 = vst [vmem:[#allocation8 + $0x160] sm:$0xff] %v937
    %1088 = vst [vmem:[#allocation8 + $0x168] sm:$0xff] %v938
    %1089 = vst [vmem:[#allocation8 + $0x170] sm:$0xff] %v939
    %1090 = vst [vmem:[#allocation8 + $0x178] sm:$0xff] %v940
    %1091 = vst [vmem:[#allocation8 + $0x180] sm:$0xff] %v941
    %1092 = vst [vmem:[#allocation8 + $0x188] sm:$0xff] %v942
    %1093 = vst [vmem:[#allocation8 + $0x190] sm:$0xff] %v943
    %1094 = vst [vmem:[#allocation8 + $0x198] sm:$0xff] %v944
    %1095 = vst [vmem:[#allocation8 + $0x1a0] sm:$0xff] %v945
    %1096 = vst [vmem:[#allocation8 + $0x1a8] sm:$0xff] %v946
    %1097 = vst [vmem:[#allocation8 + $0x1b0] sm:$0xff] %v947
    %1098 = vst [vmem:[#allocation8 + $0x1b8] sm:$0xff] %v948
    %1099 = vst [vmem:[#allocation8 + $0x1c0] sm:$0xff] %v949
    %1100 = vst [vmem:[#allocation8 + $0x1c8] sm:$0xff] %v950
    %1101 = vst [vmem:[#allocation8 + $0x1d0] sm:$0xff] %v951
    %1102 = vst [vmem:[#allocation8 + $0x1d8] sm:$0xff] %v952
    %1103 = vst [vmem:[#allocation8 + $0x1e0] sm:$0xff] %v953
    %1104 = vst [vmem:[#allocation8 + $0x1e8] sm:$0xff] %v954
    %1105 = vst [vmem:[#allocation8 + $0x1f0] sm:$0xff] %v955
    %1106 = vst [vmem:[#allocation8 + $0x1f8] sm:$0xff] %v956
    %1107 = vst [vmem:[#allocation8 + $0x200] sm:$0xff] %v957
    %1108 = vst [vmem:[#allocation8 + $0x208] sm:$0xff] %v958
    %1109 = vst [vmem:[#allocation8 + $0x210] sm:$0xff] %v959
    %1110 = vst [vmem:[#allocation8 + $0x218] sm:$0xff] %v960
    %1111 = vst [vmem:[#allocation8 + $0x220] sm:$0xff] %v961
    %1112 = vst [vmem:[#allocation8 + $0x228] sm:$0xff] %v962
    %1113 = vst [vmem:[#allocation8 + $0x230] sm:$0xff] %v963
    %1114 = vst [vmem:[#allocation8 + $0x238] sm:$0xff] %v964
    %1115 = vst [vmem:[#allocation8 + $0x240] sm:$0xff] %v965
    %1116 = vst [vmem:[#allocation8 + $0x248] sm:$0xff] %v966
    %1117 = vst [vmem:[#allocation8 + $0x250] sm:$0xff] %v967
    %1118 = vst [vmem:[#allocation8 + $0x258] sm:$0xff] %v968
    %1119 = vst [vmem:[#allocation8 + $0x260] sm:$0xff] %v969
    %1120 = vst [vmem:[#allocation8 + $0x268] sm:$0xff] %v970
    %1121 = vst [vmem:[#allocation8 + $0x270] sm:$0xff] %v971
    %1122 = vst [vmem:[#allocation8 + $0x278] sm:$0xff] %v972
    %1123 = vst [vmem:[#allocation8 + $0x280] sm:$0xff] %v973
    %1124 = vst [vmem:[#allocation8 + $0x288] sm:$0xff] %v974
    %1125 = vst [vmem:[#allocation8 + $0x290] sm:$0xff] %v975
    %1126 = vst [vmem:[#allocation8 + $0x298] sm:$0xff] %v976
    %1127 = vst [vmem:[#allocation8 + $0x2a0] sm:$0xff] %v977
    %1128 = vst [vmem:[#allocation8 + $0x2a8] sm:$0xff] %v978
    %1129 = vst [vmem:[#allocation8 + $0x2b0] sm:$0xff] %v979
    %1130 = vst [vmem:[#allocation8 + $0x2b8] sm:$0xff] %v980
    %1131 = vst [vmem:[#allocation8 + $0x2c0] sm:$0xff] %v981
    %1132 = vst [vmem:[#allocation8 + $0x2c8] sm:$0xff] %v982
    %1133 = vst [vmem:[#allocation8 + $0x2d0] sm:$0xff] %v983
    %1134 = vst [vmem:[#allocation8 + $0x2d8] sm:$0xff] %v984
    %1135 = vst [vmem:[#allocation8 + $0x2e0] sm:$0xff] %v985
    %1136 = vst [vmem:[#allocation8 + $0x2e8] sm:$0xff] %v986
    %1137 = vst [vmem:[#allocation8 + $0x2f0] sm:$0xff] %v987
    %1138 = vst [vmem:[#allocation8 + $0x2f8] sm:$0xff] %v988
    %1139 = vst [vmem:[#allocation8 + $0x300] sm:$0xff] %v989
    %1140 = vst [vmem:[#allocation8 + $0x308] sm:$0xff] %v990
    %1141 = vst [vmem:[#allocation8 + $0x310] sm:$0xff] %v991
    %1142 = vst [vmem:[#allocation8 + $0x318] sm:$0xff] %v992
    %1143 = vst [vmem:[#allocation8 + $0x320] sm:$0xff] %v993
    %1144 = vst [vmem:[#allocation8 + $0x328] sm:$0xff] %v994
    %1145 = vst [vmem:[#allocation8 + $0x330] sm:$0xff] %v995
    %1146 = vst [vmem:[#allocation8 + $0x338] sm:$0xff] %v996
    %1147 = vst [vmem:[#allocation8 + $0x340] sm:$0xff] %v997
    %1148 = vst [vmem:[#allocation8 + $0x348] sm:$0xff] %v998
    %1149 = vst [vmem:[#allocation8 + $0x350] sm:$0xff] %v999
    %1150 = vst [vmem:[#allocation8 + $0x358] sm:$0xff] %v1000
    %1151 = vst [vmem:[#allocation8 + $0x360] sm:$0xff] %v1001
    %1152 = vst [vmem:[#allocation8 + $0x368] sm:$0xff] %v1002
    %1153 = vst [vmem:[#allocation8 + $0x370] sm:$0xff] %v1003
    %1154 = vst [vmem:[#allocation8 + $0x378] sm:$0xff] %v1004
    %1155 = vst [vmem:[#allocation8 + $0x380] sm:$0xff] %v1005
    %1156 = vst [vmem:[#allocation8 + $0x388] sm:$0xff] %v1006
    %1157 = vst [vmem:[#allocation8 + $0x390] sm:$0xff] %v1007
    %1158 = vst [vmem:[#allocation8 + $0x398] sm:$0xff] %v1008
    %1159 = vst [vmem:[#allocation8 + $0x3a0] sm:$0xff] %v1009
    %1160 = vst [vmem:[#allocation8 + $0x3a8] sm:$0xff] %v1010
    %1161 = vst [vmem:[#allocation8 + $0x3b0] sm:$0xff] %v1011
    %1162 = vst [vmem:[#allocation8 + $0x3b8] sm:$0xff] %v1012
    %1163 = vst [vmem:[#allocation8 + $0x3c0] sm:$0xff] %v1013
    %1164 = vst [vmem:[#allocation8 + $0x3c8] sm:$0xff] %v1014
    %1165 = vst [vmem:[#allocation8 + $0x3d0] sm:$0xff] %v1015
    %1166 = vst [vmem:[#allocation8 + $0x3d8] sm:$0xff] %v1016
    %1167 = vst [vmem:[#allocation8 + $0x3e0] sm:$0xff] %v1017
    %1168 = vst [vmem:[#allocation8 + $0x3e8] sm:$0xff] %v1018
    %1169 = vst [vmem:[#allocation8 + $0x3f0] sm:$0xff] %v1019
    %1170 = vst [vmem:[#allocation8 + $0x3f8] sm:$0xff] %v1020
    %1171 = vst [vmem:[#allocation8 + $0x400] sm:$0xff] %v1021
    %1172 = vst [vmem:[#allocation8 + $0x408] sm:$0xff] %v1022
    %1173 = vst [vmem:[#allocation8 + $0x410] sm:$0xff] %v1023
    %1174 = vst [vmem:[#allocation8 + $0x418] sm:$0xff] %v1024
    %1175 = vst [vmem:[#allocation8 + $0x420] sm:$0xff] %v1025
    %1176 = vst [vmem:[#allocation8 + $0x428] sm:$0xff] %v1026
    %1177 = vst [vmem:[#allocation8 + $0x430] sm:$0xff] %v1027
    %1178 = vst [vmem:[#allocation8 + $0x438] sm:$0xff] %v1028
    %1179 = vst [vmem:[#allocation8 + $0x440] sm:$0xff] %v1029
    %1180 = vst [vmem:[#allocation8 + $0x448] sm:$0xff] %v1030
    %1181 = vst [vmem:[#allocation8 + $0x450] sm:$0xff] %v1031
    %1182 = vst [vmem:[#allocation8 + $0x458] sm:$0xff] %v1032
    %1183 = vst [vmem:[#allocation8 + $0x460] sm:$0xff] %v1033
    %1184 = vst [vmem:[#allocation8 + $0x468] sm:$0xff] %v1034
    %1185 = vst [vmem:[#allocation8 + $0x470] sm:$0xff] %v1035
    %1186 = vst [vmem:[#allocation8 + $0x478] sm:$0xff] %v1036
    %1187 = vst [vmem:[#allocation8 + $0x480] sm:$0xff] %v1037
    %1188 = vst [vmem:[#allocation8 + $0x488] sm:$0xff] %v1038
    %1189 = vst [vmem:[#allocation8 + $0x490] sm:$0xff] %v1039
    %1190 = vst [vmem:[#allocation8 + $0x498] sm:$0xff] %v1040
    %1191 = vst [vmem:[#allocation8 + $0x4a0] sm:$0xff] %v1041
    %1192 = vst [vmem:[#allocation8 + $0x4a8] sm:$0xff] %v1042
    // Predicated region
    $region30: #{tpu_custom_call.1} parent=1 // pred_check
      _
    $region31: #{tpu_custom_call.1} parent=1 // pred_check_branch
      %1194 = sbr.rel (0) target = $region33
    $region32: #{tpu_custom_call.1} parent=1 // pred_region
      %1196 = vsyncadd [#allocation4], 0
      %s1197 = sshll.u32 [#allocation8], 4
      %s1198 = int_to_ptr.vmem [resolvable:$true] %s1197
      %s1199 = sshll.u32 %s4, 4
      %s1200 = int_to_ptr.hbm [resolvable:$true] %s1199
      %1205 = dma.vmem_to_hbm [thread:$0]  %s1198, 19200, %s1200, [#allocation4], 256, 256, 16
    $region33: #{tpu_custom_call.1} parent=1 // pred_fallthru
      _
    // Predicated region
    $region34: #{tpu_custom_call.1} parent=1 // pred_check
      _
    $region35: #{tpu_custom_call.1} parent=1 // pred_check_branch
      %1207 = sbr.rel (0) target = $region37
    $region36: #{tpu_custom_call.1} parent=1 // pred_region
      %1209 = dma.done [#allocation4], 19200
    $region37: #{tpu_custom_call.1} parent=1 // pred_fallthru
      _
    %1210 = vsyncpa [#allocation3], 1
    %1211 = vsyncpa [#allocation6], 1
    %1212 = vsyncpa [#allocation4], 1

</llo_original>
